<compile_context>
chip_gen: v6e
topology: v6e:2x2x1
jax: 0.10.0
libtpu: 0.0.40
codegen_flags: <defaults>
</compile_context>

<pallas_src>
import jax
import jax.numpy as jnp
from jax.experimental import pallas as pl
from jax.experimental.pallas import tpu as pltpu


def _identity_rotary_kernel(q_hbm_ref, k_hbm_ref, q_out_ref, k_out_ref, flag_ref):
    # Outputs alias the inputs, so the data is already in place in HBM.
    # Nothing to compute, nothing to DMA. The scalar SMEM store below is the
    # only op in the body (cost: one scalar store).
    del q_hbm_ref, k_hbm_ref, q_out_ref, k_out_ref
    flag_ref[0] = jnp.int32(1)


def identity_rotary(q, k):
    """Pallas equivalent of IdentityRotary.forward: returns (q, k) unchanged."""
    hbm = pl.BlockSpec(memory_space=pl.ANY)  # leave tensors in HBM, no auto-DMA
    return pl.pallas_call(
        _identity_rotary_kernel,
        out_shape=(
            jax.ShapeDtypeStruct(q.shape, q.dtype),
            jax.ShapeDtypeStruct(k.shape, k.dtype),
        ),
        in_specs=[hbm, hbm],
        out_specs=(hbm, hbm),
        scratch_shapes=[pltpu.SMEM((1,), jnp.int32)],
        # q_out aliases q, k_out aliases k -> zero HBM traffic inside the call.
        input_output_aliases={0: 0, 1: 1},
    )(q, k)


if __name__ == "__main__":
    key = jax.random.PRNGKey(0)
    kq, kk = jax.random.split(key)
    B, S, H = 2, 8, 32
    q = jax.random.normal(kq, (B, S, H), dtype=jnp.float32)
    k = jax.random.normal(kk, (B, S, H), dtype=jnp.float32)

    q_out, k_out = identity_rotary(q, k)
    jax.block_until_ready((q_out, k_out))

    assert q_out.shape == q.shape and q_out.dtype == q.dtype
    assert k_out.shape == k.shape and k_out.dtype == k.dtype
    assert jnp.array_equal(q_out, q) and jnp.array_equal(k_out, k)
    print("KERNEL_OK")
</pallas_src>

<mosaic_0001>
module attributes {stable_mosaic.version = 11 : i64} {
  func.func @_identity_rotary_kernel(%arg0: memref<2x8x32xf32, #tpu.memory_space<any>>, %arg1: memref<2x8x32xf32, #tpu.memory_space<any>>, %arg2: memref<2x8x32xf32, #tpu.memory_space<any>>, %arg3: memref<2x8x32xf32, #tpu.memory_space<any>>, %arg4: memref<1xi32, #tpu.memory_space<smem>>) attributes {dimension_semantics = [], scalar_prefetch = 0 : i64, scratch_operands = 1 : i64, tpu.core_type = #tpu.core_type<tc>} {
    %c1_i32 = arith.constant 1 : i32
    %c0 = arith.constant 0 : index
    %0 = memref.load %arg4[%c0] : memref<1xi32, #tpu.memory_space<smem>>
    memref.store %c1_i32, %arg4[%c0] : memref<1xi32, #tpu.memory_space<smem>>
    return
  }
}

</mosaic_0001>

<llo_original>
// kernel: tpu_custom_call.1
$region0: #{tpu_custom_call.1}
  #allocation0 [shape = 'u32[]', space=smem, size = 0x4, offset = 0x4, fixed_abs, tag = 'smem constant byte address 0x4 - core index']
  #allocation1 [shape = 'u32[144,128]{1,0:T(1,128)}', space=vmem, size = 0x12000, scoped, tag = 'internal scratch']
  #allocation2 [shape = 's32[1]{0:T(128)}', space=smem, size = 0x200, scoped, tag = 'scratch operand']
  %s0 = inlined_call_operand.hbm [shape: f32[2,8,32], index: 0, kind: input, shape index: {}, may-alias: {0,2}]
  %s1 = inlined_call_operand.hbm [shape: f32[2,8,32], index: 1, kind: input, shape index: {}, may-alias: {1,3}]
  %s2 = inlined_call_operand.hbm [shape: f32[2,8,32], index: 2, kind: output, shape index: {0}, may-alias: {0,2}]
  %s3 = inlined_call_operand.hbm [shape: f32[2,8,32], index: 3, kind: output, shape index: {1}, may-alias: {1,3}]
  %4 = xla_tuple %s2, %s3
  %s5 = sld [smem:[#allocation0]]
  $region2: #{tpu_custom_call.1} parent=0
    _
  %s7 = ssub.s32 1, %s5
  %s8 = scalar_select 0, %s7, %s5
  %s9 = scalar_lea.smem [#allocation2], 0
  %10 = sst [smem:[%s9]] 1

</llo_original>
